<compile_context>
chip_gen: v7x
topology: tpu7x:2x2x1
jax: 0.10.0
libtpu: 0.0.40
codegen_flags: <defaults>
</compile_context>

<pallas_src>
import functools

import jax
import jax.numpy as jnp
from jax.experimental import pallas as pl
from jax.experimental.pallas import tpu as pltpu

# ---------------------------------------------------------------------------
# Tiling helpers
# ---------------------------------------------------------------------------

MAX_TK = 2304                     # full-K single-step threshold
VMEM_LIMIT = 32 * 1024 * 1024     # safe on v5e/v6e/v7x; our blocks stay well under ~8 MiB


def _round_up(x, m):
    return ((x + m - 1) // m) * m


def _pick_tile_m(M):
    """Adaptive M tile: full block for small M, split in two for 256<M<=512 (dual-TC),
    else the largest tile in {512..128} with <=15% zero-row padding."""
    if M <= 256:
        return M, M
    if M <= 512:
        half = M // 2
        if half % 8 == 0:
            return half, M        # 2 parallel M blocks (v7x dual TensorCore)
        return M, M
    for tm in (512, 448, 384, 320, 256, 192, 128):
        Mp = _round_up(M, tm)
        if Mp * 100 <= M * 115:
            return tm, Mp
    return 128, _round_up(M, 128)


def _pick_tile_n(N):
    """256/512-wide N tiles; prefer >=2 N blocks when it costs nothing."""
    if N % 1024 == 0:
        return 512, N
    if N % 256 == 0:
        return 256, N
    if N <= 256:
        return N, N               # full-dim block (always legal)
    if N % 128 == 0:
        return 128, N
    return 128, _round_up(N, 128)


def _pick_tile_k(K):
    """Pad K to a 128 multiple (lane-aligned A loads); single step when it fits."""
    if K < 128:
        return K, K               # full-dim block, single reduction step
    Kp = _round_up(K, 128)
    if Kp <= MAX_TK:
        return Kp, Kp
    for tk in range(MAX_TK, 127, -128):
        if Kp % tk == 0:
            return tk, Kp
    return 128, Kp


# ---------------------------------------------------------------------------
# Pallas kernels
# ---------------------------------------------------------------------------

def _gemm_kernel_1k(a_ref, b_ref, bias_ref, *refs, relu, fuse_res):
    """Single-K-step GEMM: o = act(A @ B + bias (+ residual)), bf16 out, no scratch."""
    if fuse_res:
        res_ref, o_ref = refs
    else:
        (o_ref,) = refs
    r = jnp.dot(a_ref[...], b_ref[...], preferred_element_type=jnp.float32)
    r = r + bias_ref[...]
    if fuse_res:
        r = r + res_ref[...].astype(jnp.float32)
    if relu:
        r = jnp.maximum(r, 0.0)
    o_ref[...] = r.astype(o_ref.dtype)


def _gemm_kernel_mk(a_ref, b_ref, bias_ref, *refs, relu, fuse_res):
    """Multi-K GEMM: f32 VMEM scratch accumulator, bf16 output emitted on the last step."""
    if fuse_res:
        res_ref, o_ref, acc_ref = refs
    else:
        o_ref, acc_ref = refs
    k = pl.program_id(2)
    p = jnp.dot(a_ref[...], b_ref[...], preferred_element_type=jnp.float32)

    @pl.when(k == 0)
    def _():
        acc_ref[...] = p

    @pl.when(k > 0)
    def _():
        acc_ref[...] += p

    @pl.when(k == pl.num_programs(2) - 1)
    def _():
        r = acc_ref[...] + bias_ref[...]
        if fuse_res:
            r = r + res_ref[...].astype(jnp.float32)
        if relu:
            r = jnp.maximum(r, 0.0)
        o_ref[...] = r.astype(o_ref.dtype)


@functools.partial(jax.jit, static_argnames=("relu",))
def matmul_bias_act(a, b, bias, residual=None, relu=False):
    """a: (M, K), b: (K, N) -> bf16 MXU GEMM with fused bias / residual / ReLU, bf16 out."""
    M, K = a.shape
    _, N = b.shape
    TM, Mp = _pick_tile_m(M)
    TN, Np = _pick_tile_n(N)
    TK, Kp = _pick_tile_k(K)

    a = a.astype(jnp.bfloat16)
    b = b.astype(jnp.bfloat16)
    if Mp != M or Kp != K:
        a = jnp.pad(a, ((0, Mp - M), (0, Kp - K)))
    if Kp != K or Np != N:
        b = jnp.pad(b, ((0, Kp - K), (0, Np - N)))
    bias2 = bias.astype(jnp.float32).reshape(1, N)
    if Np != N:
        bias2 = jnp.pad(bias2, ((0, 0), (0, Np - N)))

    fuse_res = residual is not None
    nk = Kp // TK
    inputs = [a, b, bias2]

    if nk == 1:
        in_specs = [
            pl.BlockSpec((TM, TK), lambda i, j: (i, 0)),
            pl.BlockSpec((TK, TN), lambda i, j: (0, j)),
            pl.BlockSpec((1, TN), lambda i, j: (0, j)),
        ]
        out_spec = pl.BlockSpec((TM, TN), lambda i, j: (i, j))
        grid = (Mp // TM, Np // TN)
        sem = ("parallel", "parallel")
        scratch = ()
        kern = functools.partial(_gemm_kernel_1k, relu=relu, fuse_res=fuse_res)
        if fuse_res:
            r = residual.astype(jnp.bfloat16)
            if Mp != M or Np != N:
                r = jnp.pad(r, ((0, Mp - M), (0, Np - N)))
            inputs.append(r)
            in_specs.append(pl.BlockSpec((TM, TN), lambda i, j: (i, j)))
    else:
        in_specs = [
            pl.BlockSpec((TM, TK), lambda i, j, k: (i, k)),
            pl.BlockSpec((TK, TN), lambda i, j, k: (k, j)),
            pl.BlockSpec((1, TN), lambda i, j, k: (0, j)),
        ]
        out_spec = pl.BlockSpec((TM, TN), lambda i, j, k: (i, j))
        grid = (Mp // TM, Np // TN, nk)
        sem = ("parallel", "parallel", "arbitrary")
        scratch = (pltpu.VMEM((TM, TN), jnp.float32),)
        kern = functools.partial(_gemm_kernel_mk, relu=relu, fuse_res=fuse_res)
        if fuse_res:
            r = residual.astype(jnp.bfloat16)
            if Mp != M or Np != N:
                r = jnp.pad(r, ((0, Mp - M), (0, Np - N)))
            inputs.append(r)
            in_specs.append(pl.BlockSpec((TM, TN), lambda i, j, k: (i, j)))

    out = pl.pallas_call(
        kern,
        out_shape=jax.ShapeDtypeStruct((Mp, Np), jnp.bfloat16),
        grid_spec=pltpu.PrefetchScalarGridSpec(
            num_scalar_prefetch=0,
            grid=grid,
            in_specs=in_specs,
            out_specs=out_spec,
            scratch_shapes=scratch,
        ),
        compiler_params=pltpu.CompilerParams(
            dimension_semantics=sem,
            vmem_limit_bytes=VMEM_LIMIT),
    )(*inputs)
    if Mp != M or Np != N:
        out = out[:M, :N]
    return out


def _conv_taps_kernel(a_ref, b_ref, bias_ref, o_ref, *, taps, kw, wp, rows_out, relu):
    """Fused stride-1 kxk conv: accumulate the kh*kw taps in-kernel from one resident block.

    a_ref:    (1, Hp*Wp, Cin)      padded activation, flattened spatially (bf16)
    b_ref:    (taps, Cin, TN)      per-tap weight slabs (bf16)
    bias_ref: (1, TN)              folded BN bias (f32)
    o_ref:    (1, rows_out, TN)    output rows at stride Wp (contains Wp-Wo junk cols/row)
    """
    acc = None
    for t in range(taps):
        di, dj = t // kw, t % kw
        start = di * wp + dj
        a_t = a_ref[0, start:start + rows_out, :]
        p = jnp.dot(a_t, b_ref[t], preferred_element_type=jnp.float32)
        acc = p if acc is None else acc + p
    r = acc + bias_ref[...]
    if relu:
        r = jnp.maximum(r, 0.0)
    o_ref[0] = r.astype(o_ref.dtype)


def conv_kxk_s1_fused(x, w, bias, padding, relu):
    """Stride-1 kxk conv, NHWC, no im2col materialization (taps fused into the kernel)."""
    N, H, W, Cin = x.shape
    Cout, _, kh, kw = w.shape
    Hp, Wp = H + 2 * padding, W + 2 * padding
    Ho, Wo = Hp - kh + 1, Wp - kw + 1
    xp = jnp.pad(x.astype(jnp.bfloat16),
                 ((0, 0), (padding, padding), (padding, padding), (0, 0)))
    a = xp.reshape(N, Hp * Wp, Cin)
    # per-tap weight slabs: (kh*kw, Cin, Cout)
    b = jnp.transpose(w, (2, 3, 1, 0)).reshape(kh * kw, Cin, Cout).astype(jnp.bfloat16)
    bias2 = bias.astype(jnp.float32).reshape(1, Cout)

    rows_out = (Ho - 1) * Wp + Wo          # valid output rows laid out at stride Wp
    TN = Cout if Cout <= 256 else (256 if Cout % 256 == 0 else 128)

    out = pl.pallas_call(
        functools.partial(_conv_taps_kernel, taps=kh * kw, kw=kw, wp=Wp,
                          rows_out=rows_out, relu=relu),
        out_shape=jax.ShapeDtypeStruct((N, rows_out, Cout), jnp.bfloat16),
        grid_spec=pltpu.PrefetchScalarGridSpec(
            num_scalar_prefetch=0,
            grid=(N, Cout // TN),
            in_specs=[
                pl.BlockSpec((1, Hp * Wp, Cin), lambda n, j: (n, 0, 0)),
                pl.BlockSpec((kh * kw, Cin, TN), lambda n, j: (0, 0, j)),
                pl.BlockSpec((1, TN), lambda n, j: (0, j)),
            ],
            out_specs=pl.BlockSpec((1, rows_out, TN), lambda n, j: (n, 0, j)),
            scratch_shapes=(),
        ),
        compiler_params=pltpu.CompilerParams(
            dimension_semantics=("parallel", "parallel"),
            vmem_limit_bytes=VMEM_LIMIT),
    )(a, b, bias2)

    # Strip the (Wp - Wo) junk columns interleaved in the flat row index.
    out = jnp.pad(out, ((0, 0), (0, Ho * Wp - rows_out), (0, 0)))
    out = out.reshape(N, Ho, Wp, Cout)[:, :, :Wo, :]
    return out


def _max_patches_kernel(x_ref, o_ref):
    o_ref[...] = jnp.max(x_ref[...], axis=0)


def maxpool_3x3_s2_p1(x):
    """PyTorch MaxPool2d(kernel_size=3, stride=2, padding=1), NHWC, bf16, lane-dense blocks."""
    N, H, W, C = x.shape
    k, s, p = 3, 2, 1
    xb = x.astype(jnp.bfloat16)
    xp = jnp.pad(xb, ((0, 0), (p, p), (p, p), (0, 0)), constant_values=float("-inf"))
    Ho = (H + 2 * p - k) // s + 1
    Wo = (W + 2 * p - k) // s + 1
    patches = [xp[:, di:di + s * Ho:s, dj:dj + s * Wo:s, :]
               for di in range(k) for dj in range(k)]
    stacked = jnp.stack(patches, axis=0).reshape(k * k, N * Ho, Wo * C)

    P, R, L = stacked.shape
    bytes_per_row = P * L * 2
    max_rows = max(8, (2 * 1024 * 1024) // bytes_per_row)
    TMB = R if R <= max_rows else (max_rows // 8) * 8
    Rp = _round_up(R, TMB)
    if Rp != R:
        stacked = jnp.pad(stacked, ((0, 0), (0, Rp - R), (0, 0)))

    out = pl.pallas_call(
        _max_patches_kernel,
        out_shape=jax.ShapeDtypeStruct((Rp, L), stacked.dtype),
        grid_spec=pltpu.PrefetchScalarGridSpec(
            num_scalar_prefetch=0,
            grid=(Rp // TMB,),
            in_specs=[pl.BlockSpec((P, TMB, L), lambda i: (0, i, 0))],
            out_specs=pl.BlockSpec((TMB, L), lambda i: (i, 0)),
        ),
        compiler_params=pltpu.CompilerParams(
            dimension_semantics=("parallel",),
            vmem_limit_bytes=VMEM_LIMIT),
    )(stacked)
    if Rp != R:
        out = out[:R]
    return out.reshape(N, Ho, Wo, C)


# ---------------------------------------------------------------------------
# Conv dispatch (layout glue only; compute happens in the kernels above)
# ---------------------------------------------------------------------------

def conv2d_bn(x, w, bias, stride, padding, relu, residual=None):
    """x: NHWC (bf16), w: (Cout, Cin, kh, kw) BN-folded bf16, bias: (Cout,) f32."""
    N, H, W, Cin = x.shape
    Cout, _, kh, kw = w.shape
    x = x.astype(jnp.bfloat16)

    if kh == 1 and kw == 1:
        if stride > 1:
            x = x[:, ::stride, ::stride, :]
        Ho, Wo = x.shape[1], x.shape[2]
        a = x.reshape(N * Ho * Wo, Cin)
        b = w.reshape(Cout, Cin).T
        res2d = residual.reshape(N * Ho * Wo, Cout) if residual is not None else None
        out = matmul_bias_act(a, b, bias, residual=res2d, relu=relu)
        return out.reshape(N, Ho, Wo, Cout)

    if stride == 1 and residual is None:
        return conv_kxk_s1_fused(x, w, bias, padding, relu)

    # Fallback for strided spatial convs (7x7/s2 stem + three stride-2 3x3s):
    # materialized im2col feeding the tiled GEMM (K is lane-padded inside matmul_bias_act).
    xp = jnp.pad(x, ((0, 0), (padding, padding), (padding, padding), (0, 0)))
    Ho = (H + 2 * padding - kh) // stride + 1
    Wo = (W + 2 * padding - kw) // stride + 1
    cols = [xp[:, di:di + stride * Ho:stride, dj:dj + stride * Wo:stride, :]
            for di in range(kh) for dj in range(kw)]
    a = jnp.concatenate(cols, axis=-1).reshape(N * Ho * Wo, kh * kw * Cin)
    b = jnp.transpose(w, (2, 3, 1, 0)).reshape(kh * kw * Cin, Cout)
    res2d = residual.reshape(N * Ho * Wo, Cout) if residual is not None else None
    out = matmul_bias_act(a, b, bias, residual=res2d, relu=relu)
    return out.reshape(N, Ho, Wo, Cout)


# ---------------------------------------------------------------------------
# Parameter construction (deterministic, ResNet-101 shapes)
# ---------------------------------------------------------------------------

LAYER_SPECS = ((64, 3, 1), (128, 4, 2), (256, 23, 2), (512, 3, 2))


class KeyGen:
    def __init__(self, seed):
        self.key = jax.random.PRNGKey(seed)

    def __call__(self):
        self.key, sub = jax.random.split(self.key)
        return sub


def make_conv(kg, cout, cin, k):
    fan_in = cin * k * k
    return jax.random.normal(kg(), (cout, cin, k, k), jnp.float32) * (1.0 / (fan_in ** 0.5))


def make_bn(kg, c):
    gamma = 1.0 + 0.1 * jax.random.normal(kg(), (c,), jnp.float32)
    beta = 0.1 * jax.random.normal(kg(), (c,), jnp.float32)
    mean = 0.1 * jax.random.normal(kg(), (c,), jnp.float32)
    var = 1.0 + 0.1 * jnp.abs(jax.random.normal(kg(), (c,), jnp.float32))
    return gamma, beta, mean, var


def fold_bn(w, bn, eps=1e-5):
    gamma, beta, mean, var = bn
    scale = gamma / jnp.sqrt(var + eps)
    # Weights stored in bf16 (MXU-native, halves weight DMA); bias kept f32.
    w_folded = (w * scale[:, None, None, None]).astype(jnp.bfloat16)
    return w_folded, (beta - mean * scale).astype(jnp.float32)


def make_bottleneck(kg, inplanes, planes, stride):
    p = {}
    p["w1"], p["b1"] = fold_bn(make_conv(kg, planes, inplanes, 1), make_bn(kg, planes))
    p["w2"], p["b2"] = fold_bn(make_conv(kg, planes, planes, 3), make_bn(kg, planes))
    p["w3"], p["b3"] = fold_bn(make_conv(kg, planes * 4, planes, 1), make_bn(kg, planes * 4))
    if stride != 1 or inplanes != planes * 4:
        p["wd"], p["bd"] = fold_bn(make_conv(kg, planes * 4, inplanes, 1),
                                   make_bn(kg, planes * 4))
    return p


def make_layer(kg, inplanes, planes, blocks, stride):
    layer = [make_bottleneck(kg, inplanes, planes, stride)]
    inplanes = planes * 4
    for _ in range(1, blocks):
        layer.append(make_bottleneck(kg, inplanes, planes, 1))
    return layer, inplanes


def make_resnet101_params(seed=0):
    kg = KeyGen(seed)
    params = {}
    params["conv1_w"], params["conv1_b"] = fold_bn(make_conv(kg, 64, 3, 7), make_bn(kg, 64))
    layers = []
    inplanes = 64
    for planes, blocks, stride in LAYER_SPECS:
        layer, inplanes = make_layer(kg, inplanes, planes, blocks, stride)
        layers.append(layer)
    params["layers"] = layers
    return params


# ---------------------------------------------------------------------------
# Forward pass
# ---------------------------------------------------------------------------

def bottleneck_forward(x, p, stride):
    out = conv2d_bn(x, p["w1"], p["b1"], stride=1, padding=0, relu=True)
    out = conv2d_bn(out, p["w2"], p["b2"], stride=stride, padding=1, relu=True)
    if "wd" in p:
        identity = conv2d_bn(x, p["wd"], p["bd"], stride=stride, padding=0, relu=False)
    else:
        identity = x
    # conv3: residual add + ReLU fused into the GEMM epilogue.
    return conv2d_bn(out, p["w3"], p["b3"], stride=1, padding=0, relu=True,
                     residual=identity)


def resnet_forward(x_nchw, params):
    # NCHW -> NHWC
    x = jnp.transpose(x_nchw, (0, 2, 3, 1))
    x = conv2d_bn(x, params["conv1_w"], params["conv1_b"], stride=2, padding=3, relu=True)
    x = maxpool_3x3_s2_p1(x)
    for layer_params, (_, _, stride) in zip(params["layers"], LAYER_SPECS):
        for bi, p in enumerate(layer_params):
            x = bottleneck_forward(x, p, stride if bi == 0 else 1)
    # NHWC -> NCHW, f32 (match PyTorch output convention)
    return jnp.transpose(x, (0, 3, 1, 2)).astype(jnp.float32)


# ---------------------------------------------------------------------------
# Main
# ---------------------------------------------------------------------------

if __name__ == "__main__":
    params = make_resnet101_params(seed=0)

    # Small spatial input (fully-convolutional; architecture channels are fixed at 3).
    key = jax.random.PRNGKey(0)
    x = jax.random.normal(key, (2, 3, 64, 64), jnp.float32)  # NCHW like PyTorch

    fwd = jax.jit(resnet_forward)
    out = fwd(x, params)
    out = jax.block_until_ready(out)

    assert out.shape == (2, 2048, 2, 2), out.shape
    assert out.dtype == jnp.float32
    assert bool(jnp.all(jnp.isfinite(out)))
    print("KERNEL_OK")
</pallas_src>

<mosaic_0001>
module attributes {stable_mosaic.version = 11 : i64} {
  func.func @_gemm_kernel_1k(%arg0: i32, %arg1: i32, %arg2: memref<512x256xbf16, #tpu.memory_space<vmem>>, %arg3: memref<256x64xbf16, #tpu.memory_space<vmem>>, %arg4: memref<1x64xf32, #tpu.memory_space<vmem>>, %arg5: memref<512x64xbf16, #tpu.memory_space<vmem>>) attributes {dimension_semantics = [#tpu.dimension_semantics<parallel>, #tpu.dimension_semantics<parallel>], iteration_bounds = array<i64: 4, 1>, scalar_prefetch = 0 : i64, scratch_operands = 0 : i64, tpu.core_type = #tpu.core_type<tc>, window_params = [{transform_indices = @transform_0, window_bounds = array<i64: 512, 256>}, {transform_indices = @transform_1, window_bounds = array<i64: 256, 64>}, {transform_indices = @transform_2, window_bounds = array<i64: 1, 64>}, {transform_indices = @transform_3, window_bounds = array<i64: 512, 64>}]} {
    %c0 = arith.constant 0 : index
    %c0_0 = arith.constant 0 : index
    %0 = vector.load %arg2[%c0, %c0_0] : memref<512x256xbf16, #tpu.memory_space<vmem>>, vector<512x256xbf16>
    %c0_1 = arith.constant 0 : index
    %c0_2 = arith.constant 0 : index
    %1 = vector.load %arg3[%c0_1, %c0_2] : memref<256x64xbf16, #tpu.memory_space<vmem>>, vector<256x64xbf16>
    %cst = arith.constant dense<0.000000e+00> : vector<512x64xf32>
    %2 = tpu.matmul %0, %1, %cst {dimension_numbers = #tpu.dot_dimension_numbers<[1], [0], [0], [1], [0, 0, 1, 1], [], []>} : vector<512x256xbf16>, vector<256x64xbf16>, vector<512x64xf32> -> vector<512x64xf32>
    %c0_3 = arith.constant 0 : index
    %c0_4 = arith.constant 0 : index
    %3 = vector.load %arg4[%c0_3, %c0_4] : memref<1x64xf32, #tpu.memory_space<vmem>>, vector<1x64xf32>
    %4 = vector.broadcast %3 : vector<1x64xf32> to vector<512x64xf32>
    %5 = arith.addf %2, %4 : vector<512x64xf32>
    %cst_5 = arith.constant 0.000000e+00 : f32
    %6 = vector.broadcast %cst_5 : f32 to vector<512x64xf32>
    %7 = arith.maximumf %5, %6 : vector<512x64xf32>
    %8 = arith.truncf %7 : vector<512x64xf32> to vector<512x64xbf16>
    %c0_6 = arith.constant 0 : index
    %c0_7 = arith.constant 0 : index
    %9 = vector.load %arg5[%c0_6, %c0_7] : memref<512x64xbf16, #tpu.memory_space<vmem>>, vector<512x64xbf16>
    tpu.vector_store %arg5[%c0_6, %c0_7], %8 {strides = array<i32>} : memref<512x64xbf16, #tpu.memory_space<vmem>>, vector<512x64xbf16>,
    return
  }
  func.func @transform_0(%arg0: i32, %arg1: i32) -> (i32, i32) {
    %c0_i32 = arith.constant 0 : i32
    %c0_i32_0 = arith.constant 0 : i32
    return %arg0, %c0_i32 : i32, i32
  }
  func.func @transform_1(%arg0: i32, %arg1: i32) -> (i32, i32) {
    %c0_i32 = arith.constant 0 : i32
    %c0_i32_0 = arith.constant 0 : i32
    return %c0_i32, %arg1 : i32, i32
  }
  func.func @transform_2(%arg0: i32, %arg1: i32) -> (i32, i32) {
    %c0_i32 = arith.constant 0 : i32
    %c0_i32_0 = arith.constant 0 : i32
    return %c0_i32, %arg1 : i32, i32
  }
  func.func @transform_3(%arg0: i32, %arg1: i32) -> (i32, i32) {
    %c0_i32 = arith.constant 0 : i32
    return %arg0, %arg1 : i32, i32
  }
}

</mosaic_0001>

<llo_original>
// kernel: matmul_bias_act.1
$region0: #{matmul_bias_act.1}
  #allocation0 [shape = 'u32[]', space=smem, size = 0x4, offset = 0x4, fixed_abs, tag = 'smem constant byte address 0x4 - core index']
  #allocation1 [shape = 'u32[144,128]{1,0:T(1,128)}', space=vmem, size = 0x12000, scoped, tag = 'internal scratch']
  %s0 = inlined_call_operand.vmem [shape: bf16[2048,256], index: 0, kind: input, shape index: {}]
  %s1 = inlined_call_operand.vmem [shape: bf16[256,64], index: 1, kind: input, shape index: {}]
  %s2 = inlined_call_operand.vmem [shape: f32[1,64], index: 2, kind: input, shape index: {}]
  %s3 = inlined_call_operand.vmem [shape: bf16[2048,64], index: 3, kind: output, shape index: {}]
  %s4 = sld [smem:[#allocation0]]
  $region45: #{matmul_bias_act.1} parent=0
    _
  %s6 = ssub.s32 1, %s4
  %s7 = scalar_select 0, %s6, %s4
  loop: start=0, step=1, limit=6
  $region2: #{matmul_bias_act.1} parent=0 // loop_pre_header
    _
  $region3: #{matmul_bias_act.1} parent=0 // loop_header
    %s9 = sphi 0, %s13
    %p10 = scmp.ge.s32.totalorder %s9, 6
    %s16 = sphi 0, %s28
    %s17 = sphi 0, %s24
    %s18 = sphi 0, %s16
    %s19 = sphi 0, %s17
    %s20 = sphi 0, %s18
    %s21 = sphi 0, %s19
    %s31 = sphi 0, %s33
    %s34 = sphi 0, %s31
    %s35 = sphi 0, %s34
    %s51 = sphi 0, %s35
    %s57 = sphi 0, %s59
    %s60 = sphi 0, %s57
    %s61 = sphi 0, %s60
    %s77 = sphi 0, %s61
    %s83 = sphi 0, %s85
    %s86 = sphi 0, %s83
    %s87 = sphi 0, %s86
    %s103 = sphi 0, %s87
    %s111 = sphi 0, %s113
    %s114 = sphi 0, %s111
    %s115 = sphi 0, %s114
    %s131 = sphi 0, %s115
  $region4: #{matmul_bias_act.1} parent=0 // loop_header_branch
    %12 = sbr.rel (%p10) target = $region8
  $region5: #{matmul_bias_act.1} parent=0 // loop_body
    %s14 = ssub.s32 %s9, 1
    %s15 = ssub.s32 %s9, 2
    %s22 = sadd.s32 1, %s17
    %p23 = scmp.ge.s32.totalorder %s22, 1
    %s24 = scalar_select %p23, 0, %s22
    %s25 = sadd.s32 1, %s16
    %s26 = scalar_select %p23, %s25, %s16
    %p27 = scmp.ge.s32.totalorder %s26, 4
    %s28 = scalar_select %p27, 0, %s26
    %s29 = ssub.s32 %s16, %s28
    %p30 = scmp.eq.s32.totalorder %s29, 0
    %s32 = sadd.s32 %s31, 1
    %s33 = scalar_select %p30, %s31, %s32
    %p36 = pneg %p30
    %p37 = scmp.eq.s32.totalorder %s9, 3
    %p38 = por %p36, %p37
    %p39 = scmp.ne.s32.totalorder %s31, %s34
    %p40 = scmp.eq.s32.totalorder %s9, 0
    %p41 = por %p39, %p40
    %p42 = scmp.ne.s32.totalorder %s31, %s34
    %p43 = scmp.eq.s32.totalorder %s14, 3
    %p44 = por %p42, %p43
    %p45 = scmp.ne.s32.totalorder %s34, %s35
    %p46 = scmp.eq.s32.totalorder %s14, 0
    %p47 = por %p45, %p46
    %p48 = scmp.ne.s32.totalorder %s34, %s35
    %p49 = scmp.eq.s32.totalorder %s15, 3
    %p50 = por %p48, %p49
    %p52 = scmp.ne.s32.totalorder %s35, %s51
    %p53 = scmp.eq.s32.totalorder %s15, 0
    %p54 = por %p52, %p53
    %s55 = ssub.s32 %s17, %s24
    %p56 = scmp.eq.s32.totalorder %s55, 0
    %s58 = sadd.s32 %s57, 1
    %s59 = scalar_select %p56, %s57, %s58
    %p62 = pneg %p56
    %p63 = scmp.eq.s32.totalorder %s9, 3
    %p64 = por %p62, %p63
    %p65 = scmp.ne.s32.totalorder %s57, %s60
    %p66 = scmp.eq.s32.totalorder %s9, 0
    %p67 = por %p65, %p66
    %p68 = scmp.ne.s32.totalorder %s57, %s60
    %p69 = scmp.eq.s32.totalorder %s14, 3
    %p70 = por %p68, %p69
    %p71 = scmp.ne.s32.totalorder %s60, %s61
    %p72 = scmp.eq.s32.totalorder %s14, 0
    %p73 = por %p71, %p72
    %p74 = scmp.ne.s32.totalorder %s60, %s61
    %p75 = scmp.eq.s32.totalorder %s15, 3
    %p76 = por %p74, %p75
    %p78 = scmp.ne.s32.totalorder %s61, %s77
    %p79 = scmp.eq.s32.totalorder %s15, 0
    %p80 = por %p78, %p79
    %s81 = ssub.s32 %s17, %s24
    %p82 = scmp.eq.s32.totalorder %s81, 0
    %s84 = sadd.s32 %s83, 1
    %s85 = scalar_select %p82, %s83, %s84
    %p88 = pneg %p82
    %p89 = scmp.eq.s32.totalorder %s9, 3
    %p90 = por %p88, %p89
    %p91 = scmp.ne.s32.totalorder %s83, %s86
    %p92 = scmp.eq.s32.totalorder %s9, 0
    %p93 = por %p91, %p92
    %p94 = scmp.ne.s32.totalorder %s83, %s86
    %p95 = scmp.eq.s32.totalorder %s14, 3
    %p96 = por %p94, %p95
    %p97 = scmp.ne.s32.totalorder %s86, %s87
    %p98 = scmp.eq.s32.totalorder %s14, 0
    %p99 = por %p97, %p98
    %p100 = scmp.ne.s32.totalorder %s86, %s87
    %p101 = scmp.eq.s32.totalorder %s15, 3
    %p102 = por %p100, %p101
    %p104 = scmp.ne.s32.totalorder %s87, %s103
    %p105 = scmp.eq.s32.totalorder %s15, 0
    %p106 = por %p104, %p105
    %s107 = ssub.s32 %s16, %s28
    %s108 = ssub.s32 %s17, %s24
    %s109 = sor.u32 %s107, %s108
    %p110 = scmp.eq.s32.totalorder %s109, 0
    %s112 = sadd.s32 %s111, 1
    %s113 = scalar_select %p110, %s111, %s112
    %p116 = pneg %p110
    %p117 = scmp.eq.s32.totalorder %s9, 3
    %p118 = por %p116, %p117
    %p119 = scmp.ne.s32.totalorder %s111, %s114
    %p120 = scmp.eq.s32.totalorder %s9, 0
    %p121 = por %p119, %p120
    %p122 = scmp.ne.s32.totalorder %s111, %s114
    %p123 = scmp.eq.s32.totalorder %s14, 3
    %p124 = por %p122, %p123
    %p125 = scmp.ne.s32.totalorder %s114, %s115
    %p126 = scmp.eq.s32.totalorder %s14, 0
    %p127 = por %p125, %p126
    %p128 = scmp.ne.s32.totalorder %s114, %s115
    %p129 = scmp.eq.s32.totalorder %s15, 3
    %p130 = por %p128, %p129
    %p132 = scmp.ne.s32.totalorder %s115, %s131
    %p133 = scmp.eq.s32.totalorder %s15, 0
    %p134 = por %p132, %p133
    %p135 = scmp.le.s32.totalorder 1, %s9
    %p136 = scmp.lt.s32.totalorder %s9, 5
    %p137 = pnand %p135, %p136
    %p138 = pneg %p137
    // Predicated region
    $region9: #{matmul_bias_act.1} parent=5 // pred_check
      _
    $region10: #{matmul_bias_act.1} parent=5 // pred_check_branch
      %140 = sbr.rel (%p137) target = $region12
    $region11: #{matmul_bias_act.1} parent=5 // pred_region
      %s141 = ssub.s32 %s9, 1
      // Predicated region
      $region13: #{matmul_bias_act.1} parent=11 // pred_check
        %p142 = pneg %p73
      $region14: #{matmul_bias_act.1} parent=11 // pred_check_branch
        %144 = sbr.rel (%p142) target = $region16
      $region15: #{matmul_bias_act.1} parent=11 // pred_region
        %p145 = scmp.lt.s32.totalorder %s19, 0
        %s146 = scalar_select %p145, %s19, 0
        %s147 = smul.addr %s146, 4
        %s148 = scalar_lea.vmem %s1, %s147
      $region16: #{matmul_bias_act.1} parent=11 // pred_fallthru
        _
      // Predicated region
      $region17: #{matmul_bias_act.1} parent=11 // pred_check
        %p149 = pneg %p99
      $region18: #{matmul_bias_act.1} parent=11 // pred_check_branch
        %151 = sbr.rel (%p149) target = $region20
      $region19: #{matmul_bias_act.1} parent=11 // pred_region
        %p152 = scmp.lt.s32.totalorder %s19, 0
        %s153 = scalar_select %p152, %s19, 0
        %s154 = scalar_lea.vmem %s2, %s153
      $region20: #{matmul_bias_act.1} parent=11 // pred_fallthru
        _
    $region12: #{matmul_bias_act.1} parent=5 // pred_fallthru
      _
    %p155 = scmp.lt.s32.totalorder %s9, 4
    // Predicated region
    $region21: #{matmul_bias_act.1} parent=5 // pred_check
      %p156 = pneg %p155
    $region22: #{matmul_bias_act.1} parent=5 // pred_check_branch
      %158 = sbr.rel (%p156) target = $region24
    $region23: #{matmul_bias_act.1} parent=5 // pred_region
      // Predicated region
      $region25: #{matmul_bias_act.1} parent=23 // pred_check
        %p159 = pneg %p41
      $region26: #{matmul_bias_act.1} parent=23 // pred_check_branch
        %161 = sbr.rel (%p159) target = $region28
      $region27: #{matmul_bias_act.1} parent=23 // pred_region
        %s162 = smul.u32 64, %s16
        %p163 = scmp.lt.s32.totalorder %s162, 255
        %s164 = scalar_select %p163, %s162, 255
        %s165 = smul.addr %s164, 2
        %s166 = smul.addr %s165, 4
        %s167 = scalar_lea.vmem %s0, %s166
        %s168 = smul.u32 64, %s16
      $region28: #{matmul_bias_act.1} parent=23 // pred_fallthru
        _
    $region24: #{matmul_bias_act.1} parent=5 // pred_fallthru
      _
    %p169 = scmp.le.s32.totalorder 1, %s9
    %p170 = scmp.lt.s32.totalorder %s9, 5
    %p171 = pnand %p169, %p170
    %p172 = pneg %p171
    // Predicated region
    $region29: #{matmul_bias_act.1} parent=5 // pred_check
      _
    $region30: #{matmul_bias_act.1} parent=5 // pred_check_branch
      %174 = sbr.rel (%p171) target = $region32
    $region31: #{matmul_bias_act.1} parent=5 // pred_region
      %s175 = ssub.s32 %s9, 1
      %s176 = smul.u32 64, %s18
      %p177 = scmp.lt.s32.totalorder %s176, 255
      %s178 = scalar_select %p177, %s176, 255
      %s179 = smul.addr %s178, 2
      %s180 = smul.addr %s179, 4
      %s181 = scalar_lea.vmem %s0, %s180
      %p182 = pneg %p47
      %p183 = pneg %p44
      %p184 = scmp.lt.s32.totalorder %s19, 0
      %s185 = scalar_select %p184, %s19, 0
      %s186 = smul.addr %s185, 4
      %s187 = scalar_lea.vmem %s1, %s186
      %p188 = pneg %p73
      %p189 = pneg %p70
      %p190 = scmp.lt.s32.totalorder %s19, 0
      %s191 = scalar_select %p190, %s19, 0
      %s192 = scalar_lea.vmem %s2, %s191
      %p193 = pneg %p99
      %p194 = pneg %p96
      %p195 = pneg %p127
      %p196 = pneg %p124
      %s197 = smul.u32 64, %s18
      %p198 = scmp.lt.s32.totalorder %s197, 255
      %s199 = scalar_select %p198, %s197, 255
      %p200 = scmp.lt.s32.totalorder %s19, 0
      %s201 = scalar_select %p200, %s19, 0
      %s202 = sadd.s32 %s201, %s199
      %s203 = smul.addr %s202, 4
      %s204 = scalar_lea.vmem %s3, %s203
      %s205 = smul.u32 64, %s18
      %p206 = scmp.lt.s32.totalorder %s205, 255
      %s207 = scalar_select %p206, %s205, 255
      %s208 = smul.addr %s207, 2
      %s209 = smul.addr %s208, 4
      %s210 = scalar_lea.vmem %s0, %s209
      %s211 = smul.u32 64, %s18
      %p212 = scmp.lt.s32.totalorder %s19, 0
      %s213 = scalar_select %p212, %s19, 0
      %s214 = smul.addr %s213, 4
      %s215 = scalar_lea.vmem %s1, %s214
      %p216 = scmp.lt.s32.totalorder %s19, 0
      %s217 = scalar_select %p216, %s19, 0
      %s218 = scalar_lea.vmem %s2, %s217
      %s219 = smul.u32 64, %s18
      %p220 = scmp.lt.s32.totalorder %s219, 255
      %s221 = scalar_select %p220, %s219, 255
      %p222 = scmp.lt.s32.totalorder %s19, 0
      %s223 = scalar_select %p222, %s19, 0
      %s224 = sadd.s32 %s223, %s221
      %s225 = smul.addr %s224, 4
      %s226 = scalar_lea.vmem %s3, %s225
      %s227 = smul.u32 64, %s18
      %v229 = vld [vmem:[%s210] sm:$0xff]
      %v230 = vld [vmem:[%s210 + $0x8] sm:$0xff]
      %v231 = vld [vmem:[%s210 + $0x10] sm:$0xff]
      %v232 = vld [vmem:[%s210 + $0x18] sm:$0xff]
      %v233 = vld [vmem:[%s210 + $0x20] sm:$0xff]
      %v234 = vld [vmem:[%s210 + $0x28] sm:$0xff]
      %v235 = vld [vmem:[%s210 + $0x30] sm:$0xff]
      %v236 = vld [vmem:[%s210 + $0x38] sm:$0xff]
      %v237 = vld [vmem:[%s210 + $0x40] sm:$0xff]
      %v238 = vld [vmem:[%s210 + $0x48] sm:$0xff]
      %v239 = vld [vmem:[%s210 + $0x50] sm:$0xff]
      %v240 = vld [vmem:[%s210 + $0x58] sm:$0xff]
      %v241 = vld [vmem:[%s210 + $0x60] sm:$0xff]
      %v242 = vld [vmem:[%s210 + $0x68] sm:$0xff]
      %v243 = vld [vmem:[%s210 + $0x70] sm:$0xff]
      %v244 = vld [vmem:[%s210 + $0x78] sm:$0xff]
      %v245 = vld [vmem:[%s210 + $0x80] sm:$0xff]
      %v246 = vld [vmem:[%s210 + $0x88] sm:$0xff]
      %v247 = vld [vmem:[%s210 + $0x90] sm:$0xff]
      %v248 = vld [vmem:[%s210 + $0x98] sm:$0xff]
      %v249 = vld [vmem:[%s210 + $0xa0] sm:$0xff]
      %v250 = vld [vmem:[%s210 + $0xa8] sm:$0xff]
      %v251 = vld [vmem:[%s210 + $0xb0] sm:$0xff]
      %v252 = vld [vmem:[%s210 + $0xb8] sm:$0xff]
      %v253 = vld [vmem:[%s210 + $0xc0] sm:$0xff]
      %v254 = vld [vmem:[%s210 + $0xc8] sm:$0xff]
      %v255 = vld [vmem:[%s210 + $0xd0] sm:$0xff]
      %v256 = vld [vmem:[%s210 + $0xd8] sm:$0xff]
      %v257 = vld [vmem:[%s210 + $0xe0] sm:$0xff]
      %v258 = vld [vmem:[%s210 + $0xe8] sm:$0xff]
      %v259 = vld [vmem:[%s210 + $0xf0] sm:$0xff]
      %v260 = vld [vmem:[%s210 + $0xf8] sm:$0xff]
      %v261 = vld [vmem:[%s210 + $0x100] sm:$0xff]
      %v262 = vld [vmem:[%s210 + $0x108] sm:$0xff]
      %v263 = vld [vmem:[%s210 + $0x110] sm:$0xff]
      %v264 = vld [vmem:[%s210 + $0x118] sm:$0xff]
      %v265 = vld [vmem:[%s210 + $0x120] sm:$0xff]
      %v266 = vld [vmem:[%s210 + $0x128] sm:$0xff]
      %v267 = vld [vmem:[%s210 + $0x130] sm:$0xff]
      %v268 = vld [vmem:[%s210 + $0x138] sm:$0xff]
      %v269 = vld [vmem:[%s210 + $0x140] sm:$0xff]
      %v270 = vld [vmem:[%s210 + $0x148] sm:$0xff]
      %v271 = vld [vmem:[%s210 + $0x150] sm:$0xff]
      %v272 = vld [vmem:[%s210 + $0x158] sm:$0xff]
      %v273 = vld [vmem:[%s210 + $0x160] sm:$0xff]
      %v274 = vld [vmem:[%s210 + $0x168] sm:$0xff]
      %v275 = vld [vmem:[%s210 + $0x170] sm:$0xff]
      %v276 = vld [vmem:[%s210 + $0x178] sm:$0xff]
      %v277 = vld [vmem:[%s210 + $0x180] sm:$0xff]
      %v278 = vld [vmem:[%s210 + $0x188] sm:$0xff]
      %v279 = vld [vmem:[%s210 + $0x190] sm:$0xff]
      %v280 = vld [vmem:[%s210 + $0x198] sm:$0xff]
      %v281 = vld [vmem:[%s210 + $0x1a0] sm:$0xff]
      %v282 = vld [vmem:[%s210 + $0x1a8] sm:$0xff]
      %v283 = vld [vmem:[%s210 + $0x1b0] sm:$0xff]
      %v284 = vld [vmem:[%s210 + $0x1b8] sm:$0xff]
      %v285 = vld [vmem:[%s210 + $0x1c0] sm:$0xff]
      %v286 = vld [vmem:[%s210 + $0x1c8] sm:$0xff]
      %v287 = vld [vmem:[%s210 + $0x1d0] sm:$0xff]
      %v288 = vld [vmem:[%s210 + $0x1d8] sm:$0xff]
      %v289 = vld [vmem:[%s210 + $0x1e0] sm:$0xff]
      %v290 = vld [vmem:[%s210 + $0x1e8] sm:$0xff]
      %v291 = vld [vmem:[%s210 + $0x1f0] sm:$0xff]
      %v292 = vld [vmem:[%s210 + $0x1f8] sm:$0xff]
      %v293 = vld [vmem:[%s215] sm:$0xf]
      %v294 = vld [vmem:[%s215 + $0x4] sm:$0xf]
      %v295 = vld [vmem:[%s215 + $0x8] sm:$0xf]
      %v296 = vld [vmem:[%s215 + $0xc] sm:$0xf]
      %v297 = vld [vmem:[%s215 + $0x10] sm:$0xf]
      %v298 = vld [vmem:[%s215 + $0x14] sm:$0xf]
      %v299 = vld [vmem:[%s215 + $0x18] sm:$0xf]
      %v300 = vld [vmem:[%s215 + $0x1c] sm:$0xf]
      %v301 = vld [vmem:[%s215 + $0x20] sm:$0xf]
      %v302 = vld [vmem:[%s215 + $0x24] sm:$0xf]
      %v303 = vld [vmem:[%s215 + $0x28] sm:$0xf]
      %v304 = vld [vmem:[%s215 + $0x2c] sm:$0xf]
      %v305 = vld [vmem:[%s215 + $0x30] sm:$0xf]
      %v306 = vld [vmem:[%s215 + $0x34] sm:$0xf]
      %v307 = vld [vmem:[%s215 + $0x38] sm:$0xf]
      %v308 = vld [vmem:[%s215 + $0x3c] sm:$0xf]
      %v309 = vld [vmem:[%s215 + $0x40] sm:$0xf]
      %v310 = vld [vmem:[%s215 + $0x44] sm:$0xf]
      %v311 = vld [vmem:[%s215 + $0x48] sm:$0xf]
      %v312 = vld [vmem:[%s215 + $0x4c] sm:$0xf]
      %v313 = vld [vmem:[%s215 + $0x50] sm:$0xf]
      %v314 = vld [vmem:[%s215 + $0x54] sm:$0xf]
      %v315 = vld [vmem:[%s215 + $0x58] sm:$0xf]
      %v316 = vld [vmem:[%s215 + $0x5c] sm:$0xf]
      %v317 = vld [vmem:[%s215 + $0x60] sm:$0xf]
      %v318 = vld [vmem:[%s215 + $0x64] sm:$0xf]
      %v319 = vld [vmem:[%s215 + $0x68] sm:$0xf]
      %v320 = vld [vmem:[%s215 + $0x6c] sm:$0xf]
      %v321 = vld [vmem:[%s215 + $0x70] sm:$0xf]
      %v322 = vld [vmem:[%s215 + $0x74] sm:$0xf]
      %v323 = vld [vmem:[%s215 + $0x78] sm:$0xf]
      %v324 = vld [vmem:[%s215 + $0x7c] sm:$0xf]
      %v325 = vld [vmem:[%s218] sm:$0x1]
      %v327 = vlaneseq
      %v328 = vshrl.u32 %v327, 7
      %v329 = vsub.s32 0, %v328
      %v330 = vrot.slane %v325, %v329
      %v396 = vunpack.c.l.b16 %v229
      %v397 = vunpack.c.h.b16 %v229
      %v398 = vunpack.c.l.b16 %v230
      %v399 = vunpack.c.h.b16 %v230
      %v400 = vunpack.c.l.b16 %v231
      %v401 = vunpack.c.h.b16 %v231
      %v402 = vunpack.c.l.b16 %v232
      %v403 = vunpack.c.h.b16 %v232
      %v404 = vunpack.c.l.b16 %v233
      %v405 = vunpack.c.h.b16 %v233
      %v406 = vunpack.c.l.b16 %v234
      %v407 = vunpack.c.h.b16 %v234
      %v408 = vunpack.c.l.b16 %v235
      %v409 = vunpack.c.h.b16 %v235
      %v410 = vunpack.c.l.b16 %v236
      %v411 = vunpack.c.h.b16 %v236
      %v412 = vunpack.c.l.b16 %v237
      %v413 = vunpack.c.h.b16 %v237
      %v414 = vunpack.c.l.b16 %v238
      %v415 = vunpack.c.h.b16 %v238
      %v416 = vunpack.c.l.b16 %v239
      %v417 = vunpack.c.h.b16 %v239
      %v418 = vunpack.c.l.b16 %v240
      %v419 = vunpack.c.h.b16 %v240
      %v420 = vunpack.c.l.b16 %v241
      %v421 = vunpack.c.h.b16 %v241
      %v422 = vunpack.c.l.b16 %v242
      %v423 = vunpack.c.h.b16 %v242
      %v424 = vunpack.c.l.b16 %v243
      %v425 = vunpack.c.h.b16 %v243
      %v426 = vunpack.c.l.b16 %v244
      %v427 = vunpack.c.h.b16 %v244
      %v428 = vunpack.c.l.b16 %v245
      %v429 = vunpack.c.h.b16 %v245
      %v430 = vunpack.c.l.b16 %v246
      %v431 = vunpack.c.h.b16 %v246
      %v432 = vunpack.c.l.b16 %v247
      %v433 = vunpack.c.h.b16 %v247
      %v434 = vunpack.c.l.b16 %v248
      %v435 = vunpack.c.h.b16 %v248
      %v436 = vunpack.c.l.b16 %v249
      %v437 = vunpack.c.h.b16 %v249
      %v438 = vunpack.c.l.b16 %v250
      %v439 = vunpack.c.h.b16 %v250
      %v440 = vunpack.c.l.b16 %v251
      %v441 = vunpack.c.h.b16 %v251
      %v442 = vunpack.c.l.b16 %v252
      %v443 = vunpack.c.h.b16 %v252
      %v444 = vunpack.c.l.b16 %v253
      %v445 = vunpack.c.h.b16 %v253
      %v446 = vunpack.c.l.b16 %v254
      %v447 = vunpack.c.h.b16 %v254
      %v448 = vunpack.c.l.b16 %v255
      %v449 = vunpack.c.h.b16 %v255
      %v450 = vunpack.c.l.b16 %v256
      %v451 = vunpack.c.h.b16 %v256
      %v452 = vunpack.c.l.b16 %v257
      %v453 = vunpack.c.h.b16 %v257
      %v454 = vunpack.c.l.b16 %v258
      %v455 = vunpack.c.h.b16 %v258
      %v456 = vunpack.c.l.b16 %v259
      %v457 = vunpack.c.h.b16 %v259
      %v458 = vunpack.c.l.b16 %v260
      %v459 = vunpack.c.h.b16 %v260
      %v460 = vunpack.c.l.b16 %v261
      %v461 = vunpack.c.h.b16 %v261
      %v462 = vunpack.c.l.b16 %v262
      %v463 = vunpack.c.h.b16 %v262
      %v464 = vunpack.c.l.b16 %v263
      %v465 = vunpack.c.h.b16 %v263
      %v466 = vunpack.c.l.b16 %v264
      %v467 = vunpack.c.h.b16 %v264
      %v468 = vunpack.c.l.b16 %v265
      %v469 = vunpack.c.h.b16 %v265
      %v470 = vunpack.c.l.b16 %v266
      %v471 = vunpack.c.h.b16 %v266
      %v472 = vunpack.c.l.b16 %v267
      %v473 = vunpack.c.h.b16 %v267
      %v474 = vunpack.c.l.b16 %v268
      %v475 = vunpack.c.h.b16 %v268
      %v476 = vunpack.c.l.b16 %v269
      %v477 = vunpack.c.h.b16 %v269
      %v478 = vunpack.c.l.b16 %v270
      %v479 = vunpack.c.h.b16 %v270
      %v480 = vunpack.c.l.b16 %v271
      %v481 = vunpack.c.h.b16 %v271
      %v482 = vunpack.c.l.b16 %v272
      %v483 = vunpack.c.h.b16 %v272
      %v484 = vunpack.c.l.b16 %v273
      %v485 = vunpack.c.h.b16 %v273
      %v486 = vunpack.c.l.b16 %v274
      %v487 = vunpack.c.h.b16 %v274
      %v488 = vunpack.c.l.b16 %v275
      %v489 = vunpack.c.h.b16 %v275
      %v490 = vunpack.c.l.b16 %v276
      %v491 = vunpack.c.h.b16 %v276
      %v492 = vunpack.c.l.b16 %v277
      %v493 = vunpack.c.h.b16 %v277
      %v494 = vunpack.c.l.b16 %v278
      %v495 = vunpack.c.h.b16 %v278
      %v496 = vunpack.c.l.b16 %v279
      %v497 = vunpack.c.h.b16 %v279
      %v498 = vunpack.c.l.b16 %v280
      %v499 = vunpack.c.h.b16 %v280
      %v500 = vunpack.c.l.b16 %v281
      %v501 = vunpack.c.h.b16 %v281
      %v502 = vunpack.c.l.b16 %v282
      %v503 = vunpack.c.h.b16 %v282
      %v504 = vunpack.c.l.b16 %v283
      %v505 = vunpack.c.h.b16 %v283
      %v506 = vunpack.c.l.b16 %v284
      %v507 = vunpack.c.h.b16 %v284
      %v508 = vunpack.c.l.b16 %v285
      %v509 = vunpack.c.h.b16 %v285
      %v510 = vunpack.c.l.b16 %v286
      %v511 = vunpack.c.h.b16 %v286
      %v512 = vunpack.c.l.b16 %v287
      %v513 = vunpack.c.h.b16 %v287
      %v514 = vunpack.c.l.b16 %v288
      %v515 = vunpack.c.h.b16 %v288
      %v516 = vunpack.c.l.b16 %v289
      %v517 = vunpack.c.h.b16 %v289
      %v518 = vunpack.c.l.b16 %v290
      %v519 = vunpack.c.h.b16 %v290
      %v520 = vunpack.c.l.b16 %v291
      %v521 = vunpack.c.h.b16 %v291
      %v522 = vunpack.c.l.b16 %v292
      %v523 = vunpack.c.h.b16 %v292
      %v524 = vpack.c.b16 %v398, %v396
      %v525 = vpack.c.b16 %v399, %v397
      %v526 = vpack.c.b16 %v402, %v400
      %v527 = vpack.c.b16 %v403, %v401
      %v528 = vpack.c.b16 %v406, %v404
      %v529 = vpack.c.b16 %v407, %v405
      %v530 = vpack.c.b16 %v410, %v408
      %v531 = vpack.c.b16 %v411, %v409
      %v532 = vpack.c.b16 %v414, %v412
      %v533 = vpack.c.b16 %v415, %v413
      %v534 = vpack.c.b16 %v418, %v416
      %v535 = vpack.c.b16 %v419, %v417
      %v536 = vpack.c.b16 %v422, %v420
      %v537 = vpack.c.b16 %v423, %v421
      %v538 = vpack.c.b16 %v426, %v424
      %v539 = vpack.c.b16 %v427, %v425
      %v540 = vpack.c.b16 %v430, %v428
      %v541 = vpack.c.b16 %v431, %v429
      %v542 = vpack.c.b16 %v434, %v432
      %v543 = vpack.c.b16 %v435, %v433
      %v544 = vpack.c.b16 %v438, %v436
      %v545 = vpack.c.b16 %v439, %v437
      %v546 = vpack.c.b16 %v442, %v440
      %v547 = vpack.c.b16 %v443, %v441
      %v548 = vpack.c.b16 %v446, %v444
      %v549 = vpack.c.b16 %v447, %v445
      %v550 = vpack.c.b16 %v450, %v448
      %v551 = vpack.c.b16 %v451, %v449
      %v552 = vpack.c.b16 %v454, %v452
      %v553 = vpack.c.b16 %v455, %v453
      %v554 = vpack.c.b16 %v458, %v456
      %v555 = vpack.c.b16 %v459, %v457
      %v556 = vpack.c.b16 %v462, %v460
      %v557 = vpack.c.b16 %v463, %v461
      %v558 = vpack.c.b16 %v466, %v464
      %v559 = vpack.c.b16 %v467, %v465
      %v560 = vpack.c.b16 %v470, %v468
      %v561 = vpack.c.b16 %v471, %v469
      %v562 = vpack.c.b16 %v474, %v472
      %v563 = vpack.c.b16 %v475, %v473
      %v564 = vpack.c.b16 %v478, %v476
      %v565 = vpack.c.b16 %v479, %v477
      %v566 = vpack.c.b16 %v482, %v480
      %v567 = vpack.c.b16 %v483, %v481
      %v568 = vpack.c.b16 %v486, %v484
      %v569 = vpack.c.b16 %v487, %v485
      %v570 = vpack.c.b16 %v490, %v488
      %v571 = vpack.c.b16 %v491, %v489
      %v572 = vpack.c.b16 %v494, %v492
      %v573 = vpack.c.b16 %v495, %v493
      %v574 = vpack.c.b16 %v498, %v496
      %v575 = vpack.c.b16 %v499, %v497
      %v576 = vpack.c.b16 %v502, %v500
      %v577 = vpack.c.b16 %v503, %v501
      %v578 = vpack.c.b16 %v506, %v504
      %v579 = vpack.c.b16 %v507, %v505
      %v580 = vpack.c.b16 %v510, %v508
      %v581 = vpack.c.b16 %v511, %v509
      %v582 = vpack.c.b16 %v514, %v512
      %v583 = vpack.c.b16 %v515, %v513
      %v584 = vpack.c.b16 %v518, %v516
      %v585 = vpack.c.b16 %v519, %v517
      %v586 = vpack.c.b16 %v522, %v520
      %v587 = vpack.c.b16 %v523, %v521
      %v684 = vunpack.c.l.b16 %v293
      %v685 = vunpack.c.l.b16 %v294
      %v686 = vunpack.c.l.b16 %v295
      %v687 = vunpack.c.l.b16 %v296
      %v688 = vunpack.c.l.b16 %v297
      %v689 = vunpack.c.l.b16 %v298
      %v690 = vunpack.c.l.b16 %v299
      %v691 = vunpack.c.l.b16 %v300
      %v692 = vunpack.c.l.b16 %v301
      %v693 = vunpack.c.l.b16 %v302
      %v694 = vunpack.c.l.b16 %v303
      %v695 = vunpack.c.l.b16 %v304
      %v696 = vunpack.c.l.b16 %v305
      %v697 = vunpack.c.l.b16 %v306
      %v698 = vunpack.c.l.b16 %v307
      %v699 = vunpack.c.l.b16 %v308
      %v700 = vunpack.c.l.b16 %v309
      %v701 = vunpack.c.l.b16 %v310
      %v702 = vunpack.c.l.b16 %v311
      %v703 = vunpack.c.l.b16 %v312
      %v704 = vunpack.c.l.b16 %v313
      %v705 = vunpack.c.l.b16 %v314
      %v706 = vunpack.c.l.b16 %v315
      %v707 = vunpack.c.l.b16 %v316
      %v708 = vunpack.c.l.b16 %v317
      %v709 = vunpack.c.l.b16 %v318
      %v710 = vunpack.c.l.b16 %v319
      %v711 = vunpack.c.l.b16 %v320
      %v712 = vunpack.c.l.b16 %v321
      %v713 = vunpack.c.l.b16 %v322
      %v714 = vunpack.c.l.b16 %v323
      %v715 = vunpack.c.l.b16 %v324
      %v716 = vpack.c.b16 %v685, %v684
      %v717 = vpack.c.b16 %v687, %v686
      %v718 = vpack.c.b16 %v689, %v688
      %v719 = vpack.c.b16 %v691, %v690
      %v720 = vpack.c.b16 %v693, %v692
      %v721 = vpack.c.b16 %v695, %v694
      %v722 = vpack.c.b16 %v697, %v696
      %v723 = vpack.c.b16 %v699, %v698
      %v724 = vpack.c.b16 %v701, %v700
      %v725 = vpack.c.b16 %v703, %v702
      %v726 = vpack.c.b16 %v705, %v704
      %v727 = vpack.c.b16 %v707, %v706
      %v728 = vpack.c.b16 %v709, %v708
      %v729 = vpack.c.b16 %v711, %v710
      %v730 = vpack.c.b16 %v713, %v712
      %v731 = vpack.c.b16 %v715, %v714
      %748 = vmatprep.subr.bf16.mxu0 0
      %749 = vmatpush1.bf16.msra.mxu0 %v716
      %750 = vmatprep.subr.bf16.mxu0 0
      %751 = vmatpush1.bf16.msra.mxu0 %v717
      %752 = vmatprep.subr.bf16.mxu0 0
      %753 = vmatpush1.bf16.msra.mxu0 %v718
      %754 = vmatprep.subr.bf16.mxu0 0
      %755 = vmatpush1.bf16.msra.mxu0 %v719
      %756 = vmatprep.subr.bf16.mxu0 0
      %757 = vmatpush1.bf16.msra.mxu0 %v720
      %758 = vmatprep.subr.bf16.mxu0 0
      %759 = vmatpush1.bf16.msra.mxu0 %v721
      %760 = vmatprep.subr.bf16.mxu0 0
      %761 = vmatpush1.bf16.msra.mxu0 %v722
      %762 = vmatprep.subr.bf16.mxu0 0
      %763 = vmatpush1.bf16.msra.mxu0 %v723
      %764 = vmatprep.subr.bf16.mxu0 0
      %765 = vmatpush1.bf16.msra.mxu0 %v724
      %766 = vmatprep.subr.bf16.mxu0 0
      %767 = vmatpush1.bf16.msra.mxu0 %v725
      %768 = vmatprep.subr.bf16.mxu0 0
      %769 = vmatpush1.bf16.msra.mxu0 %v726
      %770 = vmatprep.subr.bf16.mxu0 0
      %771 = vmatpush1.bf16.msra.mxu0 %v727
      %772 = vmatprep.subr.bf16.mxu0 0
      %773 = vmatpush1.bf16.msra.mxu0 %v728
      %774 = vmatprep.subr.bf16.mxu0 0
      %775 = vmatpush1.bf16.msra.mxu0 %v729
      %776 = vmatprep.subr.bf16.mxu0 0
      %777 = vmatpush1.bf16.msra.mxu0 %v730
      %778 = vmatprep.subr.bf16.mxu0 0
      %779 = vmatpush1.bf16.msra.mxu0 %v731
      %780 = vmatprep.mubr.bf16.mxu0 %v525
      %781 = vmatmul.mubr.bf16.gmra.mrb[0].mxu0 %v524
      %v782 = vpop.f32.mrb[0].mxu0
      %v783 = vadd.f32 %v330, %v782
      %v784 = vpop.f32.mrb[0].mxu0
      %v785 = vpop.f32.mrb[0].mxu0
      %v786 = vadd.f32 %v330, %v785
      %v787 = vpop.f32.mrb[0].mxu0
      %788 = vmatprep.mubr.bf16.mxu0 %v527
      %789 = vmatmul.mubr.bf16.gmra.mrb[0].mxu0 %v526
      %v790 = vpop.f32.mrb[0].mxu0
      %v791 = vadd.f32 %v330, %v790
      %v792 = vpop.f32.mrb[0].mxu0
      %v793 = vpop.f32.mrb[0].mxu0
      %v794 = vadd.f32 %v330, %v793
      %v795 = vpop.f32.mrb[0].mxu0
      %796 = vmatprep.mubr.bf16.mxu0 %v529
      %797 = vmatmul.mubr.bf16.gmra.mrb[0].mxu0 %v528
      %v798 = vpop.f32.mrb[0].mxu0
      %v799 = vadd.f32 %v330, %v798
      %v800 = vpop.f32.mrb[0].mxu0
      %v801 = vpop.f32.mrb[0].mxu0
      %v802 = vadd.f32 %v330, %v801
      %v803 = vpop.f32.mrb[0].mxu0
      %804 = vmatprep.mubr.bf16.mxu0 %v531
      %805 = vmatmul.mubr.bf16.gmra.mrb[0].mxu0 %v530
      %v806 = vpop.f32.mrb[0].mxu0
      %v807 = vadd.f32 %v330, %v806
      %v808 = vpop.f32.mrb[0].mxu0
      %v809 = vpop.f32.mrb[0].mxu0
      %v810 = vadd.f32 %v330, %v809
      %v811 = vpop.f32.mrb[0].mxu0
      %812 = vmatprep.mubr.bf16.mxu0 %v533
      %813 = vmatmul.mubr.bf16.gmra.mrb[0].mxu0 %v532
      %v814 = vpop.f32.mrb[0].mxu0
      %v815 = vadd.f32 %v330, %v814
      %v816 = vpop.f32.mrb[0].mxu0
      %v817 = vpop.f32.mrb[0].mxu0
      %v818 = vadd.f32 %v330, %v817
      %v819 = vpop.f32.mrb[0].mxu0
      %820 = vmatprep.mubr.bf16.mxu0 %v535
      %821 = vmatmul.mubr.bf16.gmra.mrb[0].mxu0 %v534
      %v822 = vpop.f32.mrb[0].mxu0
      %v823 = vadd.f32 %v330, %v822
      %v824 = vpop.f32.mrb[0].mxu0
      %v825 = vpop.f32.mrb[0].mxu0
      %v826 = vadd.f32 %v330, %v825
      %v827 = vpop.f32.mrb[0].mxu0
      %828 = vmatprep.mubr.bf16.mxu0 %v537
      %829 = vmatmul.mubr.bf16.gmra.mrb[0].mxu0 %v536
      %v830 = vpop.f32.mrb[0].mxu0
      %v831 = vadd.f32 %v330, %v830
      %v832 = vpop.f32.mrb[0].mxu0
      %v833 = vpop.f32.mrb[0].mxu0
      %v834 = vadd.f32 %v330, %v833
      %v835 = vpop.f32.mrb[0].mxu0
      %836 = vmatprep.mubr.bf16.mxu0 %v539
      %837 = vmatmul.mubr.bf16.gmra.mrb[0].mxu0 %v538
      %v838 = vpop.f32.mrb[0].mxu0
      %v839 = vadd.f32 %v330, %v838
      %v840 = vpop.f32.mrb[0].mxu0
      %v841 = vpop.f32.mrb[0].mxu0
      %v842 = vadd.f32 %v330, %v841
      %v843 = vpop.f32.mrb[0].mxu0
      %844 = vmatprep.mubr.bf16.mxu0 %v541
      %845 = vmatmul.mubr.bf16.gmra.mrb[0].mxu0 %v540
      %v846 = vpop.f32.mrb[0].mxu0
      %v847 = vadd.f32 %v330, %v846
      %v848 = vpop.f32.mrb[0].mxu0
      %v849 = vpop.f32.mrb[0].mxu0
      %v850 = vadd.f32 %v330, %v849
      %v851 = vpop.f32.mrb[0].mxu0
      %852 = vmatprep.mubr.bf16.mxu0 %v543
      %853 = vmatmul.mubr.bf16.gmra.mrb[0].mxu0 %v542
      %v854 = vpop.f32.mrb[0].mxu0
      %v855 = vadd.f32 %v330, %v854
      %v856 = vpop.f32.mrb[0].mxu0
      %v857 = vpop.f32.mrb[0].mxu0
      %v858 = vadd.f32 %v330, %v857
      %v859 = vpop.f32.mrb[0].mxu0
      %860 = vmatprep.mubr.bf16.mxu0 %v545
      %861 = vmatmul.mubr.bf16.gmra.mrb[0].mxu0 %v544
      %v862 = vpop.f32.mrb[0].mxu0
      %v863 = vadd.f32 %v330, %v862
      %v864 = vpop.f32.mrb[0].mxu0
      %v865 = vpop.f32.mrb[0].mxu0
      %v866 = vadd.f32 %v330, %v865
      %v867 = vpop.f32.mrb[0].mxu0
      %868 = vmatprep.mubr.bf16.mxu0 %v547
      %869 = vmatmul.mubr.bf16.gmra.mrb[0].mxu0 %v546
      %v870 = vpop.f32.mrb[0].mxu0
      %v871 = vadd.f32 %v330, %v870
      %v872 = vpop.f32.mrb[0].mxu0
      %v873 = vpop.f32.mrb[0].mxu0
      %v874 = vadd.f32 %v330, %v873
      %v875 = vpop.f32.mrb[0].mxu0
      %876 = vmatprep.mubr.bf16.mxu0 %v549
      %877 = vmatmul.mubr.bf16.gmra.mrb[0].mxu0 %v548
      %v878 = vpop.f32.mrb[0].mxu0
      %v879 = vadd.f32 %v330, %v878
      %v880 = vpop.f32.mrb[0].mxu0
      %v881 = vpop.f32.mrb[0].mxu0
      %v882 = vadd.f32 %v330, %v881
      %v883 = vpop.f32.mrb[0].mxu0
      %884 = vmatprep.mubr.bf16.mxu0 %v551
      %885 = vmatmul.mubr.bf16.gmra.mrb[0].mxu0 %v550
      %v886 = vpop.f32.mrb[0].mxu0
      %v887 = vadd.f32 %v330, %v886
      %v888 = vpop.f32.mrb[0].mxu0
      %v889 = vpop.f32.mrb[0].mxu0
      %v890 = vadd.f32 %v330, %v889
      %v891 = vpop.f32.mrb[0].mxu0
      %892 = vmatprep.mubr.bf16.mxu0 %v553
      %893 = vmatmul.mubr.bf16.gmra.mrb[0].mxu0 %v552
      %v894 = vpop.f32.mrb[0].mxu0
      %v895 = vadd.f32 %v330, %v894
      %v896 = vpop.f32.mrb[0].mxu0
      %v897 = vpop.f32.mrb[0].mxu0
      %v898 = vadd.f32 %v330, %v897
      %v899 = vpop.f32.mrb[0].mxu0
      %900 = vmatprep.mubr.bf16.mxu0 %v555
      %901 = vmatmul.mubr.bf16.gmra.mrb[0].mxu0 %v554
      %v902 = vpop.f32.mrb[0].mxu0
      %v903 = vadd.f32 %v330, %v902
      %v904 = vpop.f32.mrb[0].mxu0
      %v905 = vpop.f32.mrb[0].mxu0
      %v906 = vadd.f32 %v330, %v905
      %v907 = vpop.f32.mrb[0].mxu0
      %908 = vmatprep.mubr.bf16.mxu0 %v557
      %909 = vmatmul.mubr.bf16.gmra.mrb[0].mxu0 %v556
      %v910 = vpop.f32.mrb[0].mxu0
      %v911 = vadd.f32 %v330, %v910
      %v912 = vpop.f32.mrb[0].mxu0
      %v913 = vpop.f32.mrb[0].mxu0
      %v914 = vadd.f32 %v330, %v913
      %v915 = vpop.f32.mrb[0].mxu0
      %916 = vmatprep.mubr.bf16.mxu0 %v559
      %917 = vmatmul.mubr.bf16.gmra.mrb[0].mxu0 %v558
      %v918 = vpop.f32.mrb[0].mxu0
      %v919 = vadd.f32 %v330, %v918
      %v920 = vpop.f32.mrb[0].mxu0
      %v921 = vpop.f32.mrb[0].mxu0
      %v922 = vadd.f32 %v330, %v921
      %v923 = vpop.f32.mrb[0].mxu0
      %924 = vmatprep.mubr.bf16.mxu0 %v561
      %925 = vmatmul.mubr.bf16.gmra.mrb[0].mxu0 %v560
      %v926 = vpop.f32.mrb[0].mxu0
      %v927 = vadd.f32 %v330, %v926
      %v928 = vpop.f32.mrb[0].mxu0
      %v929 = vpop.f32.mrb[0].mxu0
      %v930 = vadd.f32 %v330, %v929
      %v931 = vpop.f32.mrb[0].mxu0
      %932 = vmatprep.mubr.bf16.mxu0 %v563
      %933 = vmatmul.mubr.bf16.gmra.mrb[0].mxu0 %v562
      %v934 = vpop.f32.mrb[0].mxu0
      %v935 = vadd.f32 %v330, %v934
      %v936 = vpop.f32.mrb[0].mxu0
      %v937 = vpop.f32.mrb[0].mxu0
      %v938 = vadd.f32 %v330, %v937
      %v939 = vpop.f32.mrb[0].mxu0
      %940 = vmatprep.mubr.bf16.mxu0 %v565
      %941 = vmatmul.mubr.bf16.gmra.mrb[0].mxu0 %v564
      %v942 = vpop.f32.mrb[0].mxu0
      %v943 = vadd.f32 %v330, %v942
      %v944 = vpop.f32.mrb[0].mxu0
      %v945 = vpop.f32.mrb[0].mxu0
      %v946 = vadd.f32 %v330, %v945
      %v947 = vpop.f32.mrb[0].mxu0
      %948 = vmatprep.mubr.bf16.mxu0 %v567
      %949 = vmatmul.mubr.bf16.gmra.mrb[0].mxu0 %v566
      %v950 = vpop.f32.mrb[0].mxu0
      %v951 = vadd.f32 %v330, %v950
      %v952 = vpop.f32.mrb[0].mxu0
      %v953 = vpop.f32.mrb[0].mxu0
      %v954 = vadd.f32 %v330, %v953
      %v955 = vpop.f32.mrb[0].mxu0
      %956 = vmatprep.mubr.bf16.mxu0 %v569
      %957 = vmatmul.mubr.bf16.gmra.mrb[0].mxu0 %v568
      %v958 = vpop.f32.mrb[0].mxu0
      %v959 = vadd.f32 %v330, %v958
      %v960 = vpop.f32.mrb[0].mxu0
      %v961 = vpop.f32.mrb[0].mxu0
      %v962 = vadd.f32 %v330, %v961
      %v963 = vpop.f32.mrb[0].mxu0
      %964 = vmatprep.mubr.bf16.mxu0 %v571
      %965 = vmatmul.mubr.bf16.gmra.mrb[0].mxu0 %v570
      %v966 = vpop.f32.mrb[0].mxu0
      %v967 = vadd.f32 %v330, %v966
      %v968 = vpop.f32.mrb[0].mxu0
      %v969 = vpop.f32.mrb[0].mxu0
      %v970 = vadd.f32 %v330, %v969
      %v971 = vpop.f32.mrb[0].mxu0
      %972 = vmatprep.mubr.bf16.mxu0 %v573
      %973 = vmatmul.mubr.bf16.gmra.mrb[0].mxu0 %v572
      %v974 = vpop.f32.mrb[0].mxu0
      %v975 = vadd.f32 %v330, %v974
      %v976 = vpop.f32.mrb[0].mxu0
      %v977 = vpop.f32.mrb[0].mxu0
      %v978 = vadd.f32 %v330, %v977
      %v979 = vpop.f32.mrb[0].mxu0
      %980 = vmatprep.mubr.bf16.mxu0 %v575
      %981 = vmatmul.mubr.bf16.gmra.mrb[0].mxu0 %v574
      %v982 = vpop.f32.mrb[0].mxu0
      %v983 = vadd.f32 %v330, %v982
      %v984 = vpop.f32.mrb[0].mxu0
      %v985 = vpop.f32.mrb[0].mxu0
      %v986 = vadd.f32 %v330, %v985
      %v987 = vpop.f32.mrb[0].mxu0
      %988 = vmatprep.mubr.bf16.mxu0 %v577
      %989 = vmatmul.mubr.bf16.gmra.mrb[0].mxu0 %v576
      %v990 = vpop.f32.mrb[0].mxu0
      %v991 = vadd.f32 %v330, %v990
      %v992 = vpop.f32.mrb[0].mxu0
      %v993 = vpop.f32.mrb[0].mxu0
      %v994 = vadd.f32 %v330, %v993
      %v995 = vpop.f32.mrb[0].mxu0
      %996 = vmatprep.mubr.bf16.mxu0 %v579
      %997 = vmatmul.mubr.bf16.gmra.mrb[0].mxu0 %v578
      %v998 = vpop.f32.mrb[0].mxu0
      %v999 = vadd.f32 %v330, %v998
      %v1000 = vpop.f32.mrb[0].mxu0
      %v1001 = vpop.f32.mrb[0].mxu0
      %v1002 = vadd.f32 %v330, %v1001
      %v1003 = vpop.f32.mrb[0].mxu0
      %1004 = vmatprep.mubr.bf16.mxu0 %v581
      %1005 = vmatmul.mubr.bf16.gmra.mrb[0].mxu0 %v580
      %v1006 = vpop.f32.mrb[0].mxu0
      %v1007 = vadd.f32 %v330, %v1006
      %v1008 = vpop.f32.mrb[0].mxu0
      %v1009 = vpop.f32.mrb[0].mxu0
      %v1010 = vadd.f32 %v330, %v1009
      %v1011 = vpop.f32.mrb[0].mxu0
      %1012 = vmatprep.mubr.bf16.mxu0 %v583
      %1013 = vmatmul.mubr.bf16.gmra.mrb[0].mxu0 %v582
      %v1014 = vpop.f32.mrb[0].mxu0
      %v1015 = vadd.f32 %v330, %v1014
      %v1016 = vpop.f32.mrb[0].mxu0
      %v1017 = vpop.f32.mrb[0].mxu0
      %v1018 = vadd.f32 %v330, %v1017
      %v1019 = vpop.f32.mrb[0].mxu0
      %1020 = vmatprep.mubr.bf16.mxu0 %v585
      %1021 = vmatmul.mubr.bf16.gmra.mrb[0].mxu0 %v584
      %v1022 = vpop.f32.mrb[0].mxu0
      %v1023 = vadd.f32 %v330, %v1022
      %v1024 = vpop.f32.mrb[0].mxu0
      %v1025 = vpop.f32.mrb[0].mxu0
      %v1026 = vadd.f32 %v330, %v1025
      %v1027 = vpop.f32.mrb[0].mxu0
      %1028 = vmatprep.mubr.bf16.mxu0 %v587
      %1029 = vmatmul.mubr.bf16.gmra.mrb[0].mxu0 %v586
      %v1030 = vpop.f32.mrb[0].mxu0
      %v1031 = vadd.f32 %v330, %v1030
      %v1032 = vpop.f32.mrb[0].mxu0
      %v1033 = vpop.f32.mrb[0].mxu0
      %v1034 = vadd.f32 %v330, %v1033
      %v1035 = vpop.f32.mrb[0].mxu0
      %1036 = vdwg.mxu0
      %v1037 = vmax.f32 %v783, 0.0
      %v1038 = vmax.f32 %v786, 0.0
      %v1039 = vmax.f32 %v791, 0.0
      %v1040 = vmax.f32 %v794, 0.0
      %v1041 = vmax.f32 %v799, 0.0
      %v1042 = vmax.f32 %v802, 0.0
      %v1043 = vmax.f32 %v807, 0.0
      %v1044 = vmax.f32 %v810, 0.0
      %v1045 = vmax.f32 %v815, 0.0
      %v1046 = vmax.f32 %v818, 0.0
      %v1047 = vmax.f32 %v823, 0.0
      %v1048 = vmax.f32 %v826, 0.0
      %v1049 = vmax.f32 %v831, 0.0
      %v1050 = vmax.f32 %v834, 0.0
      %v1051 = vmax.f32 %v839, 0.0
      %v1052 = vmax.f32 %v842, 0.0
      %v1053 = vmax.f32 %v847, 0.0
      %v1054 = vmax.f32 %v850, 0.0
      %v1055 = vmax.f32 %v855, 0.0
      %v1056 = vmax.f32 %v858, 0.0
      %v1057 = vmax.f32 %v863, 0.0
      %v1058 = vmax.f32 %v866, 0.0
      %v1059 = vmax.f32 %v871, 0.0
      %v1060 = vmax.f32 %v874, 0.0
      %v1061 = vmax.f32 %v879, 0.0
      %v1062 = vmax.f32 %v882, 0.0
      %v1063 = vmax.f32 %v887, 0.0
      %v1064 = vmax.f32 %v890, 0.0
      %v1065 = vmax.f32 %v895, 0.0
      %v1066 = vmax.f32 %v898, 0.0
      %v1067 = vmax.f32 %v903, 0.0
      %v1068 = vmax.f32 %v906, 0.0
      %v1069 = vmax.f32 %v911, 0.0
      %v1070 = vmax.f32 %v914, 0.0
      %v1071 = vmax.f32 %v919, 0.0
      %v1072 = vmax.f32 %v922, 0.0
      %v1073 = vmax.f32 %v927, 0.0
      %v1074 = vmax.f32 %v930, 0.0
      %v1075 = vmax.f32 %v935, 0.0
      %v1076 = vmax.f32 %v938, 0.0
      %v1077 = vmax.f32 %v943, 0.0
      %v1078 = vmax.f32 %v946, 0.0
      %v1079 = vmax.f32 %v951, 0.0
      %v1080 = vmax.f32 %v954, 0.0
      %v1081 = vmax.f32 %v959, 0.0
      %v1082 = vmax.f32 %v962, 0.0
      %v1083 = vmax.f32 %v967, 0.0
      %v1084 = vmax.f32 %v970, 0.0
      %v1085 = vmax.f32 %v975, 0.0
      %v1086 = vmax.f32 %v978, 0.0
      %v1087 = vmax.f32 %v983, 0.0
      %v1088 = vmax.f32 %v986, 0.0
      %v1089 = vmax.f32 %v991, 0.0
      %v1090 = vmax.f32 %v994, 0.0
      %v1091 = vmax.f32 %v999, 0.0
      %v1092 = vmax.f32 %v1002, 0.0
      %v1093 = vmax.f32 %v1007, 0.0
      %v1094 = vmax.f32 %v1010, 0.0
      %v1095 = vmax.f32 %v1015, 0.0
      %v1096 = vmax.f32 %v1018, 0.0
      %v1097 = vmax.f32 %v1023, 0.0
      %v1098 = vmax.f32 %v1026, 0.0
      %v1099 = vmax.f32 %v1031, 0.0
      %v1100 = vmax.f32 %v1034, 0.0
      %v1101 = vpack.c.bf16 %v1038, %v1037
      %v1102 = vpack.c.bf16 %v1040, %v1039
      %v1103 = vpack.c.bf16 %v1042, %v1041
      %v1104 = vpack.c.bf16 %v1044, %v1043
      %v1105 = vpack.c.bf16 %v1046, %v1045
      %v1106 = vpack.c.bf16 %v1048, %v1047
      %v1107 = vpack.c.bf16 %v1050, %v1049
      %v1108 = vpack.c.bf16 %v1052, %v1051
      %v1109 = vpack.c.bf16 %v1054, %v1053
      %v1110 = vpack.c.bf16 %v1056, %v1055
      %v1111 = vpack.c.bf16 %v1058, %v1057
      %v1112 = vpack.c.bf16 %v1060, %v1059
      %v1113 = vpack.c.bf16 %v1062, %v1061
      %v1114 = vpack.c.bf16 %v1064, %v1063
      %v1115 = vpack.c.bf16 %v1066, %v1065
      %v1116 = vpack.c.bf16 %v1068, %v1067
      %v1117 = vpack.c.bf16 %v1070, %v1069
      %v1118 = vpack.c.bf16 %v1072, %v1071
      %v1119 = vpack.c.bf16 %v1074, %v1073
      %v1120 = vpack.c.bf16 %v1076, %v1075
      %v1121 = vpack.c.bf16 %v1078, %v1077
      %v1122 = vpack.c.bf16 %v1080, %v1079
      %v1123 = vpack.c.bf16 %v1082, %v1081
      %v1124 = vpack.c.bf16 %v1084, %v1083
      %v1125 = vpack.c.bf16 %v1086, %v1085
      %v1126 = vpack.c.bf16 %v1088, %v1087
      %v1127 = vpack.c.bf16 %v1090, %v1089
      %v1128 = vpack.c.bf16 %v1092, %v1091
      %v1129 = vpack.c.bf16 %v1094, %v1093
      %v1130 = vpack.c.bf16 %v1096, %v1095
      %v1131 = vpack.c.bf16 %v1098, %v1097
      %v1132 = vpack.c.bf16 %v1100, %v1099
      %v1165 = vunpack.c.l.b16 %v1101
      %v1166 = vunpack.c.h.b16 %v1101
      %v1167 = vunpack.c.l.b16 %v1102
      %v1168 = vunpack.c.h.b16 %v1102
      %v1169 = vunpack.c.l.b16 %v1103
      %v1170 = vunpack.c.h.b16 %v1103
      %v1171 = vunpack.c.l.b16 %v1104
      %v1172 = vunpack.c.h.b16 %v1104
      %v1173 = vunpack.c.l.b16 %v1105
      %v1174 = vunpack.c.h.b16 %v1105
      %v1175 = vunpack.c.l.b16 %v1106
      %v1176 = vunpack.c.h.b16 %v1106
      %v1177 = vunpack.c.l.b16 %v1107
      %v1178 = vunpack.c.h.b16 %v1107
      %v1179 = vunpack.c.l.b16 %v1108
      %v1180 = vunpack.c.h.b16 %v1108
      %v1181 = vunpack.c.l.b16 %v1109
      %v1182 = vunpack.c.h.b16 %v1109
      %v1183 = vunpack.c.l.b16 %v1110
      %v1184 = vunpack.c.h.b16 %v1110
      %v1185 = vunpack.c.l.b16 %v1111
      %v1186 = vunpack.c.h.b16 %v1111
      %v1187 = vunpack.c.l.b16 %v1112
      %v1188 = vunpack.c.h.b16 %v1112
      %v1189 = vunpack.c.l.b16 %v1113
      %v1190 = vunpack.c.h.b16 %v1113
      %v1191 = vunpack.c.l.b16 %v1114
      %v1192 = vunpack.c.h.b16 %v1114
      %v1193 = vunpack.c.l.b16 %v1115
      %v1194 = vunpack.c.h.b16 %v1115
      %v1195 = vunpack.c.l.b16 %v1116
      %v1196 = vunpack.c.h.b16 %v1116
      %v1197 = vunpack.c.l.b16 %v1117
      %v1198 = vunpack.c.h.b16 %v1117
      %v1199 = vunpack.c.l.b16 %v1118
      %v1200 = vunpack.c.h.b16 %v1118
      %v1201 = vunpack.c.l.b16 %v1119
      %v1202 = vunpack.c.h.b16 %v1119
      %v1203 = vunpack.c.l.b16 %v1120
      %v1204 = vunpack.c.h.b16 %v1120
      %v1205 = vunpack.c.l.b16 %v1121
      %v1206 = vunpack.c.h.b16 %v1121
      %v1207 = vunpack.c.l.b16 %v1122
      %v1208 = vunpack.c.h.b16 %v1122
      %v1209 = vunpack.c.l.b16 %v1123
      %v1210 = vunpack.c.h.b16 %v1123
      %v1211 = vunpack.c.l.b16 %v1124
      %v1212 = vunpack.c.h.b16 %v1124
      %v1213 = vunpack.c.l.b16 %v1125
      %v1214 = vunpack.c.h.b16 %v1125
      %v1215 = vunpack.c.l.b16 %v1126
      %v1216 = vunpack.c.h.b16 %v1126
      %v1217 = vunpack.c.l.b16 %v1127
      %v1218 = vunpack.c.h.b16 %v1127
      %v1219 = vunpack.c.l.b16 %v1128
      %v1220 = vunpack.c.h.b16 %v1128
      %v1221 = vunpack.c.l.b16 %v1129
      %v1222 = vunpack.c.h.b16 %v1129
      %v1223 = vunpack.c.l.b16 %v1130
      %v1224 = vunpack.c.h.b16 %v1130
      %v1225 = vunpack.c.l.b16 %v1131
      %v1226 = vunpack.c.h.b16 %v1131
      %v1227 = vunpack.c.l.b16 %v1132
      %v1228 = vunpack.c.h.b16 %v1132
      %v1229 = vpack.c.b16 %v1165, %v1165
      %v1230 = vpack.c.b16 %v1166, %v1166
      %v1231 = vpack.c.b16 %v1167, %v1167
      %v1232 = vpack.c.b16 %v1168, %v1168
      %v1233 = vpack.c.b16 %v1169, %v1169
      %v1234 = vpack.c.b16 %v1170, %v1170
      %v1235 = vpack.c.b16 %v1171, %v1171
      %v1236 = vpack.c.b16 %v1172, %v1172
      %v1237 = vpack.c.b16 %v1173, %v1173
      %v1238 = vpack.c.b16 %v1174, %v1174
      %v1239 = vpack.c.b16 %v1175, %v1175
      %v1240 = vpack.c.b16 %v1176, %v1176
      %v1241 = vpack.c.b16 %v1177, %v1177
      %v1242 = vpack.c.b16 %v1178, %v1178
      %v1243 = vpack.c.b16 %v1179, %v1179
      %v1244 = vpack.c.b16 %v1180, %v1180
      %v1245 = vpack.c.b16 %v1181, %v1181
      %v1246 = vpack.c.b16 %v1182, %v1182
      %v1247 = vpack.c.b16 %v1183, %v1183
      %v1248 = vpack.c.b16 %v1184, %v1184
      %v1249 = vpack.c.b16 %v1185, %v1185
      %v1250 = vpack.c.b16 %v1186, %v1186
      %v1251 = vpack.c.b16 %v1187, %v1187
      %v1252 = vpack.c.b16 %v1188, %v1188
      %v1253 = vpack.c.b16 %v1189, %v1189
      %v1254 = vpack.c.b16 %v1190, %v1190
      %v1255 = vpack.c.b16 %v1191, %v1191
      %v1256 = vpack.c.b16 %v1192, %v1192
      %v1257 = vpack.c.b16 %v1193, %v1193
      %v1258 = vpack.c.b16 %v1194, %v1194
      %v1259 = vpack.c.b16 %v1195, %v1195
      %v1260 = vpack.c.b16 %v1196, %v1196
      %v1261 = vpack.c.b16 %v1197, %v1197
      %v1262 = vpack.c.b16 %v1198, %v1198
      %v1263 = vpack.c.b16 %v1199, %v1199
      %v1264 = vpack.c.b16 %v1200, %v1200
      %v1265 = vpack.c.b16 %v1201, %v1201
      %v1266 = vpack.c.b16 %v1202, %v1202
      %v1267 = vpack.c.b16 %v1203, %v1203
      %v1268 = vpack.c.b16 %v1204, %v1204
      %v1269 = vpack.c.b16 %v1205, %v1205
      %v1270 = vpack.c.b16 %v1206, %v1206
      %v1271 = vpack.c.b16 %v1207, %v1207
      %v1272 = vpack.c.b16 %v1208, %v1208
      %v1273 = vpack.c.b16 %v1209, %v1209
      %v1274 = vpack.c.b16 %v1210, %v1210
      %v1275 = vpack.c.b16 %v1211, %v1211
      %v1276 = vpack.c.b16 %v1212, %v1212
      %v1277 = vpack.c.b16 %v1213, %v1213
      %v1278 = vpack.c.b16 %v1214, %v1214
      %v1279 = vpack.c.b16 %v1215, %v1215
      %v1280 = vpack.c.b16 %v1216, %v1216
      %v1281 = vpack.c.b16 %v1217, %v1217
      %v1282 = vpack.c.b16 %v1218, %v1218
      %v1283 = vpack.c.b16 %v1219, %v1219
      %v1284 = vpack.c.b16 %v1220, %v1220
      %v1285 = vpack.c.b16 %v1221, %v1221
      %v1286 = vpack.c.b16 %v1222, %v1222
      %v1287 = vpack.c.b16 %v1223, %v1223
      %v1288 = vpack.c.b16 %v1224, %v1224
      %v1289 = vpack.c.b16 %v1225, %v1225
      %v1290 = vpack.c.b16 %v1226, %v1226
      %v1291 = vpack.c.b16 %v1227, %v1227
      %v1292 = vpack.c.b16 %v1228, %v1228
      %vm1357 = vcmask 519168
      %1358 = vst.msk [vmem:[%s226] sm:$0xf] %vm1357, %v1229
      %1359 = vst.msk [vmem:[%s226 + $0x4] sm:$0xf] %vm1357, %v1230
      %1360 = vst.msk [vmem:[%s226 + $0x8] sm:$0xf] %vm1357, %v1231
      %1361 = vst.msk [vmem:[%s226 + $0xc] sm:$0xf] %vm1357, %v1232
      %1362 = vst.msk [vmem:[%s226 + $0x10] sm:$0xf] %vm1357, %v1233
      %1363 = vst.msk [vmem:[%s226 + $0x14] sm:$0xf] %vm1357, %v1234
      %1364 = vst.msk [vmem:[%s226 + $0x18] sm:$0xf] %vm1357, %v1235
      %1365 = vst.msk [vmem:[%s226 + $0x1c] sm:$0xf] %vm1357, %v1236
      %1366 = vst.msk [vmem:[%s226 + $0x20] sm:$0xf] %vm1357, %v1237
      %1367 = vst.msk [vmem:[%s226 + $0x24] sm:$0xf] %vm1357, %v1238
      %1368 = vst.msk [vmem:[%s226 + $0x28] sm:$0xf] %vm1357, %v1239
      %1369 = vst.msk [vmem:[%s226 + $0x2c] sm:$0xf] %vm1357, %v1240
      %1370 = vst.msk [vmem:[%s226 + $0x30] sm:$0xf] %vm1357, %v1241
      %1371 = vst.msk [vmem:[%s226 + $0x34] sm:$0xf] %vm1357, %v1242
      %1372 = vst.msk [vmem:[%s226 + $0x38] sm:$0xf] %vm1357, %v1243
      %1373 = vst.msk [vmem:[%s226 + $0x3c] sm:$0xf] %vm1357, %v1244
      %1374 = vst.msk [vmem:[%s226 + $0x40] sm:$0xf] %vm1357, %v1245
      %1375 = vst.msk [vmem:[%s226 + $0x44] sm:$0xf] %vm1357, %v1246
      %1376 = vst.msk [vmem:[%s226 + $0x48] sm:$0xf] %vm1357, %v1247
      %1377 = vst.msk [vmem:[%s226 + $0x4c] sm:$0xf] %vm1357, %v1248
      %1378 = vst.msk [vmem:[%s226 + $0x50] sm:$0xf] %vm1357, %v1249
      %1379 = vst.msk [vmem:[%s226 + $0x54] sm:$0xf] %vm1357, %v1250
      %1380 = vst.msk [vmem:[%s226 + $0x58] sm:$0xf] %vm1357, %v1251
      %1381 = vst.msk [vmem:[%s226 + $0x5c] sm:$0xf] %vm1357, %v1252
      %1382 = vst.msk [vmem:[%s226 + $0x60] sm:$0xf] %vm1357, %v1253
      %1383 = vst.msk [vmem:[%s226 + $0x64] sm:$0xf] %vm1357, %v1254
      %1384 = vst.msk [vmem:[%s226 + $0x68] sm:$0xf] %vm1357, %v1255
      %1385 = vst.msk [vmem:[%s226 + $0x6c] sm:$0xf] %vm1357, %v1256
      %1386 = vst.msk [vmem:[%s226 + $0x70] sm:$0xf] %vm1357, %v1257
      %1387 = vst.msk [vmem:[%s226 + $0x74] sm:$0xf] %vm1357, %v1258
      %1388 = vst.msk [vmem:[%s226 + $0x78] sm:$0xf] %vm1357, %v1259
      %1389 = vst.msk [vmem:[%s226 + $0x7c] sm:$0xf] %vm1357, %v1260
      %1390 = vst.msk [vmem:[%s226 + $0x80] sm:$0xf] %vm1357, %v1261
      %1391 = vst.msk [vmem:[%s226 + $0x84] sm:$0xf] %vm1357, %v1262
      %1392 = vst.msk [vmem:[%s226 + $0x88] sm:$0xf] %vm1357, %v1263
      %1393 = vst.msk [vmem:[%s226 + $0x8c] sm:$0xf] %vm1357, %v1264
      %1394 = vst.msk [vmem:[%s226 + $0x90] sm:$0xf] %vm1357, %v1265
      %1395 = vst.msk [vmem:[%s226 + $0x94] sm:$0xf] %vm1357, %v1266
      %1396 = vst.msk [vmem:[%s226 + $0x98] sm:$0xf] %vm1357, %v1267
      %1397 = vst.msk [vmem:[%s226 + $0x9c] sm:$0xf] %vm1357, %v1268
      %1398 = vst.msk [vmem:[%s226 + $0xa0] sm:$0xf] %vm1357, %v1269
      %1399 = vst.msk [vmem:[%s226 + $0xa4] sm:$0xf] %vm1357, %v1270
      %1400 = vst.msk [vmem:[%s226 + $0xa8] sm:$0xf] %vm1357, %v1271
      %1401 = vst.msk [vmem:[%s226 + $0xac] sm:$0xf] %vm1357, %v1272
      %1402 = vst.msk [vmem:[%s226 + $0xb0] sm:$0xf] %vm1357, %v1273
      %1403 = vst.msk [vmem:[%s226 + $0xb4] sm:$0xf] %vm1357, %v1274
      %1404 = vst.msk [vmem:[%s226 + $0xb8] sm:$0xf] %vm1357, %v1275
      %1405 = vst.msk [vmem:[%s226 + $0xbc] sm:$0xf] %vm1357, %v1276
      %1406 = vst.msk [vmem:[%s226 + $0xc0] sm:$0xf] %vm1357, %v1277
      %1407 = vst.msk [vmem:[%s226 + $0xc4] sm:$0xf] %vm1357, %v1278
      %1408 = vst.msk [vmem:[%s226 + $0xc8] sm:$0xf] %vm1357, %v1279
      %1409 = vst.msk [vmem:[%s226 + $0xcc] sm:$0xf] %vm1357, %v1280
      %1410 = vst.msk [vmem:[%s226 + $0xd0] sm:$0xf] %vm1357, %v1281
      %1411 = vst.msk [vmem:[%s226 + $0xd4] sm:$0xf] %vm1357, %v1282
      %1412 = vst.msk [vmem:[%s226 + $0xd8] sm:$0xf] %vm1357, %v1283
      %1413 = vst.msk [vmem:[%s226 + $0xdc] sm:$0xf] %vm1357, %v1284
      %1414 = vst.msk [vmem:[%s226 + $0xe0] sm:$0xf] %vm1357, %v1285
      %1415 = vst.msk [vmem:[%s226 + $0xe4] sm:$0xf] %vm1357, %v1286
      %1416 = vst.msk [vmem:[%s226 + $0xe8] sm:$0xf] %vm1357, %v1287
      %1417 = vst.msk [vmem:[%s226 + $0xec] sm:$0xf] %vm1357, %v1288
      %1418 = vst.msk [vmem:[%s226 + $0xf0] sm:$0xf] %vm1357, %v1289
      %1419 = vst.msk [vmem:[%s226 + $0xf4] sm:$0xf] %vm1357, %v1290
      %1420 = vst.msk [vmem:[%s226 + $0xf8] sm:$0xf] %vm1357, %v1291
      %1421 = vst.msk [vmem:[%s226 + $0xfc] sm:$0xf] %vm1357, %v1292
      %s1422 = smul.u32 64, %s18
      %p1423 = scmp.lt.s32.totalorder %s1422, 255
      %s1424 = scalar_select %p1423, %s1422, 255
      %p1425 = scmp.lt.s32.totalorder %s19, 0
      %s1426 = scalar_select %p1425, %s19, 0
      %s1427 = sadd.s32 %s1426, %s1424
      %s1428 = smul.addr %s1427, 4
      %s1429 = scalar_lea.vmem %s3, %s1428
      // Predicated region
      $region33: #{matmul_bias_act.1} parent=31 // pred_check
        %p1430 = pneg %p124
      $region34: #{matmul_bias_act.1} parent=31 // pred_check_branch
        %1432 = sbr.rel (%p1430) target = $region36
      $region35: #{matmul_bias_act.1} parent=31 // pred_region
        %s1433 = smul.u32 64, %s18
      $region36: #{matmul_bias_act.1} parent=31 // pred_fallthru
        _
    $region32: #{matmul_bias_act.1} parent=5 // pred_fallthru
      _
    %p1434 = scmp.le.s32.totalorder 2, %s9
    // Predicated region
    $region37: #{matmul_bias_act.1} parent=5 // pred_check
      %p1435 = pneg %p1434
    $region38: #{matmul_bias_act.1} parent=5 // pred_check_branch
      %1437 = sbr.rel (%p1435) target = $region40
    $region39: #{matmul_bias_act.1} parent=5 // pred_region
      %s1438 = ssub.s32 %s9, 2
      // Predicated region
      $region41: #{matmul_bias_act.1} parent=39 // pred_check
        %p1439 = pneg %p130
      $region42: #{matmul_bias_act.1} parent=39 // pred_check_branch
        %1441 = sbr.rel (%p1439) target = $region44
      $region43: #{matmul_bias_act.1} parent=39 // pred_region
        %s1442 = smul.u32 64, %s20
        %p1443 = scmp.lt.s32.totalorder %s1442, 255
        %s1444 = scalar_select %p1443, %s1442, 255
        %p1445 = scmp.lt.s32.totalorder %s21, 0
        %s1446 = scalar_select %p1445, %s21, 0
        %s1447 = sadd.s32 %s1446, %s1444
        %s1448 = smul.addr %s1447, 4
        %s1449 = scalar_lea.vmem %s3, %s1448
      $region44: #{matmul_bias_act.1} parent=39 // pred_fallthru
        _
    $region40: #{matmul_bias_act.1} parent=5 // pred_fallthru
      _
  $region6: #{matmul_bias_act.1} parent=0 // loop_footer
    %s13 = sadd.s32 1, %s9
  $region7: #{matmul_bias_act.1} parent=0 // loop_footer_branch
    %8 = sbr.rel target = $region3
  $region8: #{matmul_bias_act.1} parent=0 // loop_exit
    _

</llo_original>
